<compile_context>
chip_gen: v7x
topology: tpu7x:2x2x1
jax: 0.10.0
libtpu: 0.0.40
codegen_flags: <defaults>
</compile_context>

<pallas_src>
import functools

import jax
import jax.numpy as jnp
from jax.experimental import pallas as pl
from jax.experimental.pallas import tpu as pltpu


def _round_up(x, m):
    return ((x + m - 1) // m) * m


def simple_mil_kernel(x_ref, w1_ref, b1_ref, w2_ref, b2_ref, w3_ref, b3_ref,
                      out_ref, max_ref, *, n_instances, mask_needed):
    """Grid = (bag_tiles, instance_tiles); instance axis is the reduction."""
    j = pl.program_id(1)
    last_j = pl.num_programs(1) - 1

    # ---- init running max at the first instance tile of each bag tile ----
    @pl.when(j == 0)
    def _():
        max_ref[...] = jnp.full(max_ref.shape, -jnp.inf, dtype=max_ref.dtype)

    # ---- feature extractor: two MXU matmuls (f32 accum) + VPU ReLU ----
    x = x_ref[...]                                   # (BT, IT, D), f32 or bf16
    bt, it, d = x.shape
    # inst_tile is a multiple of 8 (or == N) so this merge of the leading
    # dims is layout-friendly (no hidden VMEM copy for the common case).
    x2 = x.reshape(bt * it, d)

    h1 = jnp.dot(x2, w1_ref[...], preferred_element_type=jnp.float32)
    h1 = jnp.maximum(h1 + b1_ref[...], 0.0)          # (BT*IT, 64) f32
    h2 = jnp.dot(h1, w2_ref[...], preferred_element_type=jnp.float32)
    h2 = jnp.maximum(h2 + b2_ref[...], 0.0)          # (BT*IT, 32) f32
    h2 = h2.reshape(bt, it, h2.shape[-1])            # (BT, IT, 32)

    tile_max = jnp.max(h2, axis=1)                   # (BT, 32)

    # ---- MIL max-pool: per-bag running max across instance tiles ----
    if mask_needed:
        # Padded instance rows exist only in the last instance tile; mask them
        # there and keep every other step mask-free.
        @pl.when(j < last_j)
        def _():
            max_ref[...] = jnp.maximum(max_ref[...], tile_max)

        @pl.when(j == last_j)
        def _():
            inst_idx = j * it + jax.lax.broadcasted_iota(jnp.int32, h2.shape, 1)
            masked = jnp.where(inst_idx < n_instances, h2, -jnp.inf)
            max_ref[...] = jnp.maximum(max_ref[...], jnp.max(masked, axis=1))
    else:
        max_ref[...] = jnp.maximum(max_ref[...], tile_max)

    # ---- classifier head only at the last instance tile ----
    @pl.when(j == last_j)
    def _():
        m = max_ref[...]                                           # (BT, 32)
        # (32 -> 1) head as VPU multiply + cross-lane reduce (w3 is a (1, 32)
        # row) instead of a wasted (…,1)-wide MXU push.
        logit = jnp.sum(m * w3_ref[...], axis=-1, keepdims=True) + b3_ref[...]
        prob = jax.nn.sigmoid(logit)                               # (BT, 1)
        # Lane-dense (unmasked) store; wrapper keeps column 0.
        out_ref[...] = jnp.broadcast_to(prob, out_ref.shape)


def _tpu_budget():
    """Generation-aware (rows-per-block, vmem limit, buffer depth)."""
    try:
        vmem_bytes = getattr(pltpu.get_tpu_info(), "vmem_capacity_bytes",
                             64 * 1024 * 1024)
    except Exception:  # non-TPU / interpret fallback: be conservative (v7x-like)
        vmem_bytes = 64 * 1024 * 1024
    big_vmem = vmem_bytes >= 100 * 1024 * 1024          # v5e / v6e: 128 MiB
    max_rows = 8192 if big_vmem else 4096               # v7x: 64 MiB VMEM
    vmem_limit = (64 if big_vmem else 48) * 1024 * 1024
    n_buf = 3 if big_vmem else 2
    return max_rows, vmem_limit, n_buf


def simple_mil_forward_batched(bags, params, *, bag_tile=None, inst_tile=None):
    """bags: (B, N, input_dim) f32 or bf16 -> (B, 1) f32 probabilities."""
    w1, b1, w2, b2, w3, b3 = (params["w1"], params["b1"], params["w2"],
                              params["b2"], params["w3"], params["b3"])
    B, N, D = bags.shape
    max_rows, vmem_limit, n_buf = _tpu_budget()

    # ---- tile sizing ----
    if bag_tile is None:
        # >= 2 programs on the parallel bag axis so both v7x TCs get work.
        bag_tile = min(_round_up(pl.cdiv(B, 2), 8), 64)
        # Prefer a bag_tile that divides B exactly -> no padded copy of bags.
        for t in range(bag_tile, 7, -8):
            if B % t == 0:
                bag_tile = t
                break
    if inst_tile is None:
        cap = max(8, max_rows // bag_tile)
        # Full-N blocks (no instance padding, no mask) whenever they fit VMEM.
        inst_tile = N if N <= cap else (cap // 8) * 8

    b_pad = _round_up(B, bag_tile)
    n_pad = _round_up(N, inst_tile)
    mask_needed = n_pad != N

    # Stream W1 in the same dtype as the bag (bf16 halves the dominant HBM
    # read stream on v6e/v7x); everything downstream of the f32 accumulators
    # stays f32.
    w1c = w1.astype(bags.dtype)
    w3_row = w3.reshape(1, -1)                        # (32,1) -> (1,32)

    # Only materialize a padded copy when the tiles genuinely don't divide
    # B / N (never for the feature dim).
    if (b_pad, n_pad) != (B, N):
        bags_in = jnp.zeros((b_pad, n_pad, D), bags.dtype).at[:B, :N, :].set(bags)
    else:
        bags_in = bags

    grid = (b_pad // bag_tile, n_pad // inst_tile)

    def _resident(shape):
        # Full-array block + constant index_map -> DMA'd once, stays in VMEM.
        return pl.BlockSpec(shape, lambda i, j: (0,) * len(shape))

    # Streamed bag tiles; deepen prefetch when VMEM allows it.
    bag_spec_kwargs = {}
    if hasattr(pl, "Buffered"):
        bag_spec_kwargs["pipeline_mode"] = pl.Buffered(n_buf)
    try:
        bag_spec = pl.BlockSpec((bag_tile, inst_tile, D),
                                lambda i, j: (i, j, 0), **bag_spec_kwargs)
    except TypeError:
        bag_spec = pl.BlockSpec((bag_tile, inst_tile, D), lambda i, j: (i, j, 0))

    kernel = functools.partial(simple_mil_kernel,
                               n_instances=N, mask_needed=mask_needed)

    out = pl.pallas_call(
        kernel,
        out_shape=jax.ShapeDtypeStruct((b_pad, 128), jnp.float32),
        grid_spec=pltpu.PrefetchScalarGridSpec(
            num_scalar_prefetch=0,
            grid=grid,
            in_specs=[
                bag_spec,                             # streamed bag tiles
                _resident(w1c.shape),                 # W1 (D, 64)
                _resident(b1.shape),                  # b1 (1, 64)
                _resident(w2.shape),                  # W2 (64, 32)
                _resident(b2.shape),                  # b2 (1, 32)
                _resident(w3_row.shape),              # W3 row (1, 32)
                _resident(b3.shape),                  # b3 (1, 1)
            ],
            out_specs=pl.BlockSpec((bag_tile, 128), lambda i, j: (i, 0)),
            scratch_shapes=[pltpu.VMEM((bag_tile, 32), jnp.float32)],
        ),
        compiler_params=pltpu.CompilerParams(
            dimension_semantics=("parallel", "arbitrary"),
            vmem_limit_bytes=vmem_limit,
        ),
    )(bags_in, w1c, b1, w2, b2, w3_row, b3)

    return out[:B, :1]                                # (B, 1) f32


def simple_mil_forward(bag, params):
    """Single-bag API matching the original module: (N, D) -> (1, 1)."""
    return simple_mil_forward_batched(bag[None], params)


def init_params(key, input_dim=140):
    """PyTorch-Linear-like init; weights stored transposed as (in, out)."""
    ks = jax.random.split(key, 6)

    def linear(kw, kb, fan_in, fan_out):
        bound = 1.0 / jnp.sqrt(fan_in)
        w = jax.random.uniform(kw, (fan_in, fan_out), jnp.float32, -bound, bound)
        b = jax.random.uniform(kb, (1, fan_out), jnp.float32, -bound, bound)
        return w, b

    w1, b1 = linear(ks[0], ks[1], input_dim, 64)
    w2, b2 = linear(ks[2], ks[3], 64, 32)
    w3, b3 = linear(ks[4], ks[5], 32, 1)
    return dict(w1=w1, b1=b1, w2=w2, b2=b2, w3=w3, b3=b3)


def reference_forward(bag, p):
    h = jnp.maximum(bag @ p["w1"] + p["b1"], 0.0)
    h = jnp.maximum(h @ p["w2"] + p["b2"], 0.0)
    m = jnp.max(h, axis=0, keepdims=True)
    return jax.nn.sigmoid(m @ p["w3"] + p["b3"])      # (1, 1)


if __name__ == "__main__":
    key = jax.random.PRNGKey(0)
    k_bag, k_params = jax.random.split(key)

    input_dim = 140
    n_instances = 8
    batch = 16
    bags = jax.random.normal(k_bag, (batch, n_instances, input_dim), jnp.float32)
    params = init_params(k_params, input_dim)

    # f32 batched path.
    out = jax.block_until_ready(simple_mil_forward_batched(bags, params))
    ref = jax.vmap(lambda b: reference_forward(b, params))(bags).reshape(batch, 1)
    assert out.shape == (batch, 1)
    assert jnp.allclose(out, ref, atol=1e-5, rtol=1e-5), (out, ref)

    # bf16-streamed path (stands in for an upstream bf16 producer; in-kernel
    # accumulation and the head remain f32, so only input quantization differs).
    bags_bf16 = bags.astype(jnp.bfloat16)
    out_bf16 = jax.block_until_ready(simple_mil_forward_batched(bags_bf16, params))
    ref_bf16 = jax.vmap(
        lambda b: reference_forward(b.astype(jnp.float32), params)
    )(bags_bf16).reshape(batch, 1)
    assert jnp.allclose(out_bf16, ref_bf16, atol=3e-2, rtol=3e-2), (out_bf16, ref_bf16)

    # Original single-bag semantics.
    out1 = jax.block_until_ready(simple_mil_forward(bags[0], params))
    ref1 = reference_forward(bags[0], params)
    assert out1.shape == (1, 1)
    assert jnp.allclose(out1, ref1, atol=1e-5, rtol=1e-5), (out1, ref1)

    print("KERNEL_OK")
</pallas_src>

<mosaic_0001>
module attributes {stable_mosaic.version = 11 : i64} {
  func.func @simple_mil_kernel(%arg0: i32, %arg1: i32, %arg2: memref<8x8x140xf32, #tpu.memory_space<vmem>>, %arg3: memref<140x64xf32, #tpu.memory_space<vmem>>, %arg4: memref<1x64xf32, #tpu.memory_space<vmem>>, %arg5: memref<64x32xf32, #tpu.memory_space<vmem>>, %arg6: memref<1x32xf32, #tpu.memory_space<vmem>>, %arg7: memref<1x32xf32, #tpu.memory_space<vmem>>, %arg8: memref<1x1xf32, #tpu.memory_space<vmem>>, %arg9: memref<8x128xf32, #tpu.memory_space<vmem>>, %arg10: memref<8x32xf32, #tpu.memory_space<vmem>>) attributes {dimension_semantics = [#tpu.dimension_semantics<parallel>, #tpu.dimension_semantics<arbitrary>], iteration_bounds = array<i64: 2, 1>, scalar_prefetch = 0 : i64, scratch_operands = 1 : i64, tpu.core_type = #tpu.core_type<tc>, window_params = [{pipeline_mode = #tpu.pipeline_mode<double_buffered>, transform_indices = @transform_0, window_bounds = array<i64: 8, 8, 140>}, {pipeline_mode = #tpu.pipeline_mode<synchronous>, transform_indices = @transform_1, window_bounds = array<i64: 140, 64>}, {pipeline_mode = #tpu.pipeline_mode<synchronous>, transform_indices = @transform_2, window_bounds = array<i64: 1, 64>}, {pipeline_mode = #tpu.pipeline_mode<synchronous>, transform_indices = @transform_3, window_bounds = array<i64: 64, 32>}, {pipeline_mode = #tpu.pipeline_mode<synchronous>, transform_indices = @transform_4, window_bounds = array<i64: 1, 32>}, {pipeline_mode = #tpu.pipeline_mode<synchronous>, transform_indices = @transform_5, window_bounds = array<i64: 1, 32>}, {pipeline_mode = #tpu.pipeline_mode<synchronous>, transform_indices = @transform_6, window_bounds = array<i64: 1, 1>}, {transform_indices = @transform_7, window_bounds = array<i64: 8, 128>}]} {
    %c0_i32 = arith.constant 0 : i32
    %0 = arith.cmpi eq, %arg1, %c0_i32 : i32
    %1 = arith.extui %0 : i1 to i32
    %c0_i32_0 = arith.constant 0 : i32
    %2 = arith.cmpi ne, %1, %c0_i32_0 : i32
    scf.if %2 {
      %cst_21 = arith.constant 0xFF800000 : f32
      %27 = vector.broadcast %cst_21 : f32 to vector<8x32xf32>
      %c0_22 = arith.constant 0 : index
      %c0_23 = arith.constant 0 : index
      %28 = vector.load %arg10[%c0_22, %c0_23] : memref<8x32xf32, #tpu.memory_space<vmem>>, vector<8x32xf32>
      tpu.vector_store %arg10[%c0_22, %c0_23], %27 {strides = array<i32>} : memref<8x32xf32, #tpu.memory_space<vmem>>, vector<8x32xf32>,
    } else {
    }
    %c0 = arith.constant 0 : index
    %c0_1 = arith.constant 0 : index
    %c0_2 = arith.constant 0 : index
    %3 = vector.load %arg2[%c0, %c0_1, %c0_2] : memref<8x8x140xf32, #tpu.memory_space<vmem>>, vector<8x8x140xf32>
    %4 = vector.shape_cast %3 : vector<8x8x140xf32> to vector<64x140xf32>
    %c0_3 = arith.constant 0 : index
    %c0_4 = arith.constant 0 : index
    %5 = vector.load %arg3[%c0_3, %c0_4] : memref<140x64xf32, #tpu.memory_space<vmem>>, vector<140x64xf32>
    %cst = arith.constant dense<0.000000e+00> : vector<64x64xf32>
    %6 = tpu.matmul %4, %5, %cst {dimension_numbers = #tpu.dot_dimension_numbers<[1], [0], [0], [1], [0, 0, 1, 1], [], []>} : vector<64x140xf32>, vector<140x64xf32>, vector<64x64xf32> -> vector<64x64xf32>
    %c0_5 = arith.constant 0 : index
    %c0_6 = arith.constant 0 : index
    %7 = vector.load %arg4[%c0_5, %c0_6] : memref<1x64xf32, #tpu.memory_space<vmem>>, vector<1x64xf32>
    %8 = vector.broadcast %7 : vector<1x64xf32> to vector<64x64xf32>
    %9 = arith.addf %6, %8 : vector<64x64xf32>
    %cst_7 = arith.constant 0.000000e+00 : f32
    %10 = vector.broadcast %cst_7 : f32 to vector<64x64xf32>
    %11 = arith.maximumf %9, %10 : vector<64x64xf32>
    %c0_8 = arith.constant 0 : index
    %c0_9 = arith.constant 0 : index
    %12 = vector.load %arg5[%c0_8, %c0_9] : memref<64x32xf32, #tpu.memory_space<vmem>>, vector<64x32xf32>
    %cst_10 = arith.constant dense<0.000000e+00> : vector<64x32xf32>
    %13 = tpu.matmul %11, %12, %cst_10 {dimension_numbers = #tpu.dot_dimension_numbers<[1], [0], [0], [1], [0, 0, 1, 1], [], []>} : vector<64x64xf32>, vector<64x32xf32>, vector<64x32xf32> -> vector<64x32xf32>
    %c0_11 = arith.constant 0 : index
    %c0_12 = arith.constant 0 : index
    %14 = vector.load %arg6[%c0_11, %c0_12] : memref<1x32xf32, #tpu.memory_space<vmem>>, vector<1x32xf32>
    %15 = vector.broadcast %14 : vector<1x32xf32> to vector<64x32xf32>
    %16 = arith.addf %13, %15 : vector<64x32xf32>
    %cst_13 = arith.constant 0.000000e+00 : f32
    %17 = vector.broadcast %cst_13 : f32 to vector<64x32xf32>
    %18 = arith.maximumf %16, %17 : vector<64x32xf32>
    %19 = vector.shape_cast %18 : vector<64x32xf32> to vector<8x8x32xf32>
    %cst_14 = arith.constant dense<0xFF800000> : vector<8x32xf32>
    %20 = vector.multi_reduction <maximumf>, %19, %cst_14 [1] : vector<8x8x32xf32> to vector<8x32xf32>
    %c0_15 = arith.constant 0 : index
    %c0_16 = arith.constant 0 : index
    %21 = vector.load %arg10[%c0_15, %c0_16] : memref<8x32xf32, #tpu.memory_space<vmem>>, vector<8x32xf32>
    %22 = arith.maximumf %21, %20 : vector<8x32xf32>
    %c0_17 = arith.constant 0 : index
    %c0_18 = arith.constant 0 : index
    %23 = vector.load %arg10[%c0_17, %c0_18] : memref<8x32xf32, #tpu.memory_space<vmem>>, vector<8x32xf32>
    tpu.vector_store %arg10[%c0_17, %c0_18], %22 {strides = array<i32>} : memref<8x32xf32, #tpu.memory_space<vmem>>, vector<8x32xf32>,
    %c0_i32_19 = arith.constant 0 : i32
    %24 = arith.cmpi eq, %arg1, %c0_i32_19 : i32
    %25 = arith.extui %24 : i1 to i32
    %c0_i32_20 = arith.constant 0 : i32
    %26 = arith.cmpi ne, %25, %c0_i32_20 : i32
    scf.if %26 {
      %c0_21 = arith.constant 0 : index
      %c0_22 = arith.constant 0 : index
      %27 = vector.load %arg10[%c0_21, %c0_22] : memref<8x32xf32, #tpu.memory_space<vmem>>, vector<8x32xf32>
      %c0_23 = arith.constant 0 : index
      %c0_24 = arith.constant 0 : index
      %28 = vector.load %arg7[%c0_23, %c0_24] : memref<1x32xf32, #tpu.memory_space<vmem>>, vector<1x32xf32>
      %29 = vector.broadcast %28 : vector<1x32xf32> to vector<8x32xf32>
      %30 = arith.mulf %27, %29 : vector<8x32xf32>
      %cst_25 = arith.constant dense<0.000000e+00> : vector<8xf32>
      %31 = vector.multi_reduction <add>, %30, %cst_25 [1] : vector<8x32xf32> to vector<8xf32>
      %32 = vector.shape_cast %31 : vector<8xf32> to vector<8x1xf32>
      %c0_26 = arith.constant 0 : index
      %c0_27 = arith.constant 0 : index
      %33 = vector.load %arg8[%c0_26, %c0_27] : memref<1x1xf32, #tpu.memory_space<vmem>>, vector<1x1xf32>
      %34 = vector.broadcast %33 : vector<1x1xf32> to vector<8x1xf32>
      %35 = arith.addf %32, %34 : vector<8x1xf32>
      %36 = arith.negf %35 : vector<8x1xf32>
      %37 = math.exp %36 : vector<8x1xf32>
      %cst_28 = arith.constant 1.000000e+00 : f32
      %38 = vector.broadcast %cst_28 : f32 to vector<8x1xf32>
      %39 = arith.addf %38, %37 : vector<8x1xf32>
      %40 = arith.divf %38, %39 : vector<8x1xf32>
      %41 = vector.shape_cast %40 : vector<8x1xf32> to vector<8x1xf32>
      %42 = vector.broadcast %41 : vector<8x1xf32> to vector<8x128xf32>
      %c0_29 = arith.constant 0 : index
      %c0_30 = arith.constant 0 : index
      %43 = vector.load %arg9[%c0_29, %c0_30] : memref<8x128xf32, #tpu.memory_space<vmem>>, vector<8x128xf32>
      tpu.vector_store %arg9[%c0_29, %c0_30], %42 {strides = array<i32>} : memref<8x128xf32, #tpu.memory_space<vmem>>, vector<8x128xf32>,
    } else {
    }
    return
  }
  func.func @transform_0(%arg0: i32, %arg1: i32) -> (i32, i32, i32) {
    %c0_i32 = arith.constant 0 : i32
    %c0_i32_0 = arith.constant 0 : i32
    return %arg0, %arg1, %c0_i32 : i32, i32, i32
  }
  func.func @transform_1(%arg0: i32, %arg1: i32) -> (i32, i32) {
    %c0_i32 = arith.constant 0 : i32
    %c0_i32_0 = arith.constant 0 : i32
    %c0_i32_1 = arith.constant 0 : i32
    return %c0_i32, %c0_i32_0 : i32, i32
  }
  func.func @transform_2(%arg0: i32, %arg1: i32) -> (i32, i32) {
    %c0_i32 = arith.constant 0 : i32
    %c0_i32_0 = arith.constant 0 : i32
    %c0_i32_1 = arith.constant 0 : i32
    return %c0_i32, %c0_i32_0 : i32, i32
  }
  func.func @transform_3(%arg0: i32, %arg1: i32) -> (i32, i32) {
    %c0_i32 = arith.constant 0 : i32
    %c0_i32_0 = arith.constant 0 : i32
    %c0_i32_1 = arith.constant 0 : i32
    return %c0_i32, %c0_i32_0 : i32, i32
  }
  func.func @transform_4(%arg0: i32, %arg1: i32) -> (i32, i32) {
    %c0_i32 = arith.constant 0 : i32
    %c0_i32_0 = arith.constant 0 : i32
    %c0_i32_1 = arith.constant 0 : i32
    return %c0_i32, %c0_i32_0 : i32, i32
  }
  func.func @transform_5(%arg0: i32, %arg1: i32) -> (i32, i32) {
    %c0_i32 = arith.constant 0 : i32
    %c0_i32_0 = arith.constant 0 : i32
    %c0_i32_1 = arith.constant 0 : i32
    return %c0_i32, %c0_i32_0 : i32, i32
  }
  func.func @transform_6(%arg0: i32, %arg1: i32) -> (i32, i32) {
    %c0_i32 = arith.constant 0 : i32
    %c0_i32_0 = arith.constant 0 : i32
    %c0_i32_1 = arith.constant 0 : i32
    return %c0_i32, %c0_i32_0 : i32, i32
  }
  func.func @transform_7(%arg0: i32, %arg1: i32) -> (i32, i32) {
    %c0_i32 = arith.constant 0 : i32
    %c0_i32_0 = arith.constant 0 : i32
    return %arg0, %c0_i32 : i32, i32
  }
}

</mosaic_0001>

<llo_original>
// kernel: tpu_custom_call.1
$region0: #{tpu_custom_call.1}
  #allocation0 [shape = 'u32[]', space=smem, size = 0x4, offset = 0x4, fixed_abs, tag = 'smem constant byte address 0x4 - core index']
  #allocation1 [shape = 'u32[144,128]{1,0:T(1,128)}', space=vmem, size = 0x12000, scoped, tag = 'internal scratch']
  #allocation2 [shape = 'f32[8,32]{1,0:T(8,128)}', space=vmem, size = 0x1000, scoped, tag = 'scratch operand']
  #allocation3 [shape = 'f32[1,1]{1,0:T(1,128)S(1)}', space=vmem, size = 0x200, scoped, tag = 'scoped memory for tpu_custom_call.1']
  %s0 = inlined_call_operand.vmem [shape: f32[16,8,140], index: 0, kind: input, shape index: {}]
  %s1 = inlined_call_operand.vmem [shape: f32[140,64], index: 1, kind: input, shape index: {}]
  %s2 = inlined_call_operand.vmem [shape: f32[1,64], index: 2, kind: input, shape index: {}]
  %s3 = inlined_call_operand.vmem [shape: f32[64,32], index: 3, kind: input, shape index: {}]
  %s4 = inlined_call_operand.vmem [shape: f32[1,32], index: 4, kind: input, shape index: {}]
  %s5 = inlined_call_operand.vmem [shape: f32[1,32], index: 5, kind: input, shape index: {}]
  %s6 = inlined_call_operand.<no memory space> [shape: f32[1,1], index: 6, kind: input, shape index: {}]
  %s7 = inlined_call_operand.hbm [shape: f32[16,128], index: 7, kind: output, shape index: {}]
  %s8 = sld [smem:[#allocation0]]
  $region69: #{tpu_custom_call.1} parent=0
    _
  %s10 = ssub.s32 1, %s8
  %s11 = scalar_select 0, %s10, %s8
  %v12 = vstv %s6
  %13 = vst [vmem:[#allocation3] sm:$0x1] %v12
  $region1: #{tpu_custom_call.1} parent=0
    #allocation4 [shape = 'u8[8192]{0}', space=vmem, size = 0x2000, scoped, tag = 'output window, operand 0']
    #allocation5 [shape = 's32[2]{0}', space=sflag, size = 0x8, scoped, tag = 'scoped memory for tpu_custom_call.1']
    %14 = vsyncpa [#allocation5], 0
    %s15 = scalar_lea.sflag [#allocation5], 1
    %16 = vsyncpa %s15, 0
    loop: start=0, step=1, limit=4
    $region2: #{tpu_custom_call.1} parent=1 // loop_pre_header
      _
    $region3: #{tpu_custom_call.1} parent=1 // loop_header
      %s18 = sphi 0, %s22
      %p19 = scmp.ge.s32.totalorder %s18, 4
      %s25 = sphi 0, %s37
      %s26 = sphi 0, %s33
      %s27 = sphi 0, %s25
      %s28 = sphi 0, %s26
      %s29 = sphi 0, %s27
      %s30 = sphi 0, %s28
      %s42 = sphi 0, %s44
      %s45 = sphi 0, %s42
      %s46 = sphi 0, %s45
      %s62 = sphi 0, %s46
      %s66 = sphi 0, %s66
      %s68 = sphi 0, %s66
      %s69 = sphi 0, %s68
      %s83 = sphi 0, %s69
      %s87 = sphi 0, %s87
      %s89 = sphi 0, %s87
      %s90 = sphi 0, %s89
      %s104 = sphi 0, %s90
      %s108 = sphi 0, %s108
      %s110 = sphi 0, %s108
      %s111 = sphi 0, %s110
      %s125 = sphi 0, %s111
      %s129 = sphi 0, %s129
      %s131 = sphi 0, %s129
      %s132 = sphi 0, %s131
      %s146 = sphi 0, %s132
      %s150 = sphi 0, %s150
      %s152 = sphi 0, %s150
      %s153 = sphi 0, %s152
      %s167 = sphi 0, %s153
      %s171 = sphi 0, %s171
      %s173 = sphi 0, %s171
      %s174 = sphi 0, %s173
      %s188 = sphi 0, %s174
      %s194 = sphi 0, %s196
      %s197 = sphi 0, %s194
      %s198 = sphi 0, %s197
      %s214 = sphi 0, %s198
    $region4: #{tpu_custom_call.1} parent=1 // loop_header_branch
      %21 = sbr.rel (%p19) target = $region8
    $region5: #{tpu_custom_call.1} parent=1 // loop_body
      %s23 = ssub.s32 %s18, 1
      %s24 = ssub.s32 %s18, 2
      %s31 = sadd.s32 1, %s26
      %p32 = scmp.ge.s32.totalorder %s31, 1
      %s33 = scalar_select %p32, 0, %s31
      %s34 = sadd.s32 1, %s25
      %s35 = scalar_select %p32, %s34, %s25
      %p36 = scmp.ge.s32.totalorder %s35, 2
      %s37 = scalar_select %p36, 0, %s35
      %s38 = ssub.s32 %s25, %s37
      %s39 = ssub.s32 %s26, %s33
      %s40 = sor.u32 %s38, %s39
      %p41 = scmp.eq.s32.totalorder %s40, 0
      %s43 = sadd.s32 %s42, 1
      %s44 = scalar_select %p41, %s42, %s43
      %p47 = pneg %p41
      %p48 = scmp.eq.s32.totalorder %s18, 1
      %p49 = por %p47, %p48
      %p50 = scmp.ne.s32.totalorder %s42, %s45
      %p51 = scmp.eq.s32.totalorder %s18, 0
      %p52 = por %p50, %p51
      %p53 = scmp.ne.s32.totalorder %s42, %s45
      %p54 = scmp.eq.s32.totalorder %s23, 1
      %p55 = por %p53, %p54
      %p56 = scmp.ne.s32.totalorder %s45, %s46
      %p57 = scmp.eq.s32.totalorder %s23, 0
      %p58 = por %p56, %p57
      %p59 = scmp.ne.s32.totalorder %s45, %s46
      %p60 = scmp.eq.s32.totalorder %s24, 1
      %p61 = por %p59, %p60
      %p63 = scmp.ne.s32.totalorder %s46, %s62
      %p64 = scmp.eq.s32.totalorder %s24, 0
      %p65 = por %p63, %p64
      %s67 = sadd.s32 %s66, 1
      %p70 = scmp.eq.s32.totalorder %s18, 1
      %p71 = scmp.ne.s32.totalorder %s66, %s68
      %p72 = scmp.eq.s32.totalorder %s18, 0
      %p73 = por %p71, %p72
      %p74 = scmp.ne.s32.totalorder %s66, %s68
      %p75 = scmp.eq.s32.totalorder %s23, 1
      %p76 = por %p74, %p75
      %p77 = scmp.ne.s32.totalorder %s68, %s69
      %p78 = scmp.eq.s32.totalorder %s23, 0
      %p79 = por %p77, %p78
      %p80 = scmp.ne.s32.totalorder %s68, %s69
      %p81 = scmp.eq.s32.totalorder %s24, 1
      %p82 = por %p80, %p81
      %p84 = scmp.ne.s32.totalorder %s69, %s83
      %p85 = scmp.eq.s32.totalorder %s24, 0
      %p86 = por %p84, %p85
      %s88 = sadd.s32 %s87, 1
      %p91 = scmp.eq.s32.totalorder %s18, 1
      %p92 = scmp.ne.s32.totalorder %s87, %s89
      %p93 = scmp.eq.s32.totalorder %s18, 0
      %p94 = por %p92, %p93
      %p95 = scmp.ne.s32.totalorder %s87, %s89
      %p96 = scmp.eq.s32.totalorder %s23, 1
      %p97 = por %p95, %p96
      %p98 = scmp.ne.s32.totalorder %s89, %s90
      %p99 = scmp.eq.s32.totalorder %s23, 0
      %p100 = por %p98, %p99
      %p101 = scmp.ne.s32.totalorder %s89, %s90
      %p102 = scmp.eq.s32.totalorder %s24, 1
      %p103 = por %p101, %p102
      %p105 = scmp.ne.s32.totalorder %s90, %s104
      %p106 = scmp.eq.s32.totalorder %s24, 0
      %p107 = por %p105, %p106
      %s109 = sadd.s32 %s108, 1
      %p112 = scmp.eq.s32.totalorder %s18, 1
      %p113 = scmp.ne.s32.totalorder %s108, %s110
      %p114 = scmp.eq.s32.totalorder %s18, 0
      %p115 = por %p113, %p114
      %p116 = scmp.ne.s32.totalorder %s108, %s110
      %p117 = scmp.eq.s32.totalorder %s23, 1
      %p118 = por %p116, %p117
      %p119 = scmp.ne.s32.totalorder %s110, %s111
      %p120 = scmp.eq.s32.totalorder %s23, 0
      %p121 = por %p119, %p120
      %p122 = scmp.ne.s32.totalorder %s110, %s111
      %p123 = scmp.eq.s32.totalorder %s24, 1
      %p124 = por %p122, %p123
      %p126 = scmp.ne.s32.totalorder %s111, %s125
      %p127 = scmp.eq.s32.totalorder %s24, 0
      %p128 = por %p126, %p127
      %s130 = sadd.s32 %s129, 1
      %p133 = scmp.eq.s32.totalorder %s18, 1
      %p134 = scmp.ne.s32.totalorder %s129, %s131
      %p135 = scmp.eq.s32.totalorder %s18, 0
      %p136 = por %p134, %p135
      %p137 = scmp.ne.s32.totalorder %s129, %s131
      %p138 = scmp.eq.s32.totalorder %s23, 1
      %p139 = por %p137, %p138
      %p140 = scmp.ne.s32.totalorder %s131, %s132
      %p141 = scmp.eq.s32.totalorder %s23, 0
      %p142 = por %p140, %p141
      %p143 = scmp.ne.s32.totalorder %s131, %s132
      %p144 = scmp.eq.s32.totalorder %s24, 1
      %p145 = por %p143, %p144
      %p147 = scmp.ne.s32.totalorder %s132, %s146
      %p148 = scmp.eq.s32.totalorder %s24, 0
      %p149 = por %p147, %p148
      %s151 = sadd.s32 %s150, 1
      %p154 = scmp.eq.s32.totalorder %s18, 1
      %p155 = scmp.ne.s32.totalorder %s150, %s152
      %p156 = scmp.eq.s32.totalorder %s18, 0
      %p157 = por %p155, %p156
      %p158 = scmp.ne.s32.totalorder %s150, %s152
      %p159 = scmp.eq.s32.totalorder %s23, 1
      %p160 = por %p158, %p159
      %p161 = scmp.ne.s32.totalorder %s152, %s153
      %p162 = scmp.eq.s32.totalorder %s23, 0
      %p163 = por %p161, %p162
      %p164 = scmp.ne.s32.totalorder %s152, %s153
      %p165 = scmp.eq.s32.totalorder %s24, 1
      %p166 = por %p164, %p165
      %p168 = scmp.ne.s32.totalorder %s153, %s167
      %p169 = scmp.eq.s32.totalorder %s24, 0
      %p170 = por %p168, %p169
      %s172 = sadd.s32 %s171, 1
      %p175 = scmp.eq.s32.totalorder %s18, 1
      %p176 = scmp.ne.s32.totalorder %s171, %s173
      %p177 = scmp.eq.s32.totalorder %s18, 0
      %p178 = por %p176, %p177
      %p179 = scmp.ne.s32.totalorder %s171, %s173
      %p180 = scmp.eq.s32.totalorder %s23, 1
      %p181 = por %p179, %p180
      %p182 = scmp.ne.s32.totalorder %s173, %s174
      %p183 = scmp.eq.s32.totalorder %s23, 0
      %p184 = por %p182, %p183
      %p185 = scmp.ne.s32.totalorder %s173, %s174
      %p186 = scmp.eq.s32.totalorder %s24, 1
      %p187 = por %p185, %p186
      %p189 = scmp.ne.s32.totalorder %s174, %s188
      %p190 = scmp.eq.s32.totalorder %s24, 0
      %p191 = por %p189, %p190
      %s192 = ssub.s32 %s25, %s37
      %p193 = scmp.eq.s32.totalorder %s192, 0
      %s195 = sadd.s32 %s194, 1
      %s196 = scalar_select %p193, %s194, %s195
      %p199 = pneg %p193
      %p200 = scmp.eq.s32.totalorder %s18, 1
      %p201 = por %p199, %p200
      %p202 = scmp.ne.s32.totalorder %s194, %s197
      %p203 = scmp.eq.s32.totalorder %s18, 0
      %p204 = por %p202, %p203
      %p205 = scmp.ne.s32.totalorder %s194, %s197
      %p206 = scmp.eq.s32.totalorder %s23, 1
      %p207 = por %p205, %p206
      %p208 = scmp.ne.s32.totalorder %s197, %s198
      %p209 = scmp.eq.s32.totalorder %s23, 0
      %p210 = por %p208, %p209
      %p211 = scmp.ne.s32.totalorder %s197, %s198
      %p212 = scmp.eq.s32.totalorder %s24, 1
      %p213 = por %p211, %p212
      %p215 = scmp.ne.s32.totalorder %s198, %s214
      %p216 = scmp.eq.s32.totalorder %s24, 0
      %p217 = por %p215, %p216
      %p218 = scmp.le.s32.totalorder 1, %s18
      %p219 = scmp.lt.s32.totalorder %s18, 3
      %p220 = pnand %p218, %p219
      %p221 = pneg %p220
      // Predicated region
      $region9: #{tpu_custom_call.1} parent=5 // pred_check
        _
      $region10: #{tpu_custom_call.1} parent=5 // pred_check_branch
        %223 = sbr.rel (%p220) target = $region12
      $region11: #{tpu_custom_call.1} parent=5 // pred_region
        %s224 = ssub.s32 %s18, 1
        // Predicated region
        $region13: #{tpu_custom_call.1} parent=11 // pred_check
          %p225 = pneg %p79
        $region14: #{tpu_custom_call.1} parent=11 // pred_check_branch
          %227 = sbr.rel (%p225) target = $region16
        $region15: #{tpu_custom_call.1} parent=11 // pred_region
          _
        $region16: #{tpu_custom_call.1} parent=11 // pred_fallthru
          _
        // Predicated region
        $region17: #{tpu_custom_call.1} parent=11 // pred_check
          %p228 = pneg %p100
        $region18: #{tpu_custom_call.1} parent=11 // pred_check_branch
          %230 = sbr.rel (%p228) target = $region20
        $region19: #{tpu_custom_call.1} parent=11 // pred_region
          _
        $region20: #{tpu_custom_call.1} parent=11 // pred_fallthru
          _
        // Predicated region
        $region21: #{tpu_custom_call.1} parent=11 // pred_check
          %p231 = pneg %p121
        $region22: #{tpu_custom_call.1} parent=11 // pred_check_branch
          %233 = sbr.rel (%p231) target = $region24
        $region23: #{tpu_custom_call.1} parent=11 // pred_region
          _
        $region24: #{tpu_custom_call.1} parent=11 // pred_fallthru
          _
        // Predicated region
        $region25: #{tpu_custom_call.1} parent=11 // pred_check
          %p234 = pneg %p142
        $region26: #{tpu_custom_call.1} parent=11 // pred_check_branch
          %236 = sbr.rel (%p234) target = $region28
        $region27: #{tpu_custom_call.1} parent=11 // pred_region
          _
        $region28: #{tpu_custom_call.1} parent=11 // pred_fallthru
          _
        // Predicated region
        $region29: #{tpu_custom_call.1} parent=11 // pred_check
          %p237 = pneg %p163
        $region30: #{tpu_custom_call.1} parent=11 // pred_check_branch
          %239 = sbr.rel (%p237) target = $region32
        $region31: #{tpu_custom_call.1} parent=11 // pred_region
          _
        $region32: #{tpu_custom_call.1} parent=11 // pred_fallthru
          _
        // Predicated region
        $region33: #{tpu_custom_call.1} parent=11 // pred_check
          %p240 = pneg %p184
        $region34: #{tpu_custom_call.1} parent=11 // pred_check_branch
          %242 = sbr.rel (%p240) target = $region36
        $region35: #{tpu_custom_call.1} parent=11 // pred_region
          _
        $region36: #{tpu_custom_call.1} parent=11 // pred_fallthru
          _
      $region12: #{tpu_custom_call.1} parent=5 // pred_fallthru
        _
      %p243 = scmp.lt.s32.totalorder %s18, 2
      // Predicated region
      $region37: #{tpu_custom_call.1} parent=5 // pred_check
        %p244 = pneg %p243
      $region38: #{tpu_custom_call.1} parent=5 // pred_check_branch
        %246 = sbr.rel (%p244) target = $region40
      $region39: #{tpu_custom_call.1} parent=5 // pred_region
        // Predicated region
        $region41: #{tpu_custom_call.1} parent=39 // pred_check
          %p247 = pneg %p52
        $region42: #{tpu_custom_call.1} parent=39 // pred_check_branch
          %249 = sbr.rel (%p247) target = $region44
        $region43: #{tpu_custom_call.1} parent=39 // pred_region
          %s250 = smul.u32 8, %s25
          %p251 = scmp.lt.s32.totalorder %s250, 15
          %s252 = scalar_select %p251, %s250, 15
          %p253 = scmp.lt.s32.totalorder %s26, 0
          %s254 = scalar_select %p253, %s26, 0
          %s255 = smul.addr %s254, 2
          %s256 = smul.addr %s252, 2
          %s257 = sadd.s32 %s255, %s256
          %s258 = smul.addr %s257, 8
          %s259 = scalar_lea.vmem %s0, %s258
          %s260 = smul.u32 8, %s25
        $region44: #{tpu_custom_call.1} parent=39 // pred_fallthru
          _
      $region40: #{tpu_custom_call.1} parent=5 // pred_fallthru
        _
      %p261 = scmp.le.s32.totalorder 1, %s18
      %p262 = scmp.lt.s32.totalorder %s18, 3
      %p263 = pnand %p261, %p262
      %p264 = pneg %p263
      // Predicated region
      $region45: #{tpu_custom_call.1} parent=5 // pred_check
        _
      $region46: #{tpu_custom_call.1} parent=5 // pred_check_branch
        %266 = sbr.rel (%p263) target = $region48
      $region47: #{tpu_custom_call.1} parent=5 // pred_region
        %s267 = ssub.s32 %s18, 1
        %s268 = smul.u32 8, %s27
        %p269 = scmp.lt.s32.totalorder %s268, 15
        %s270 = scalar_select %p269, %s268, 15
        %p271 = scmp.lt.s32.totalorder %s28, 0
        %s272 = scalar_select %p271, %s28, 0
        %s273 = smul.addr %s272, 2
        %s274 = smul.addr %s270, 2
        %s275 = sadd.s32 %s273, %s274
        %s276 = smul.addr %s275, 8
        %s277 = scalar_lea.vmem %s0, %s276
        %p278 = pneg %p58
        %p279 = pneg %p55
        %p280 = pneg %p79
        %p281 = pneg %p76
        %p282 = pneg %p100
        %p283 = pneg %p97
        %p284 = pneg %p121
        %p285 = pneg %p118
        %p286 = pneg %p142
        %p287 = pneg %p139
        %p288 = pneg %p163
        %p289 = pneg %p160
        %p290 = pneg %p184
        %p291 = pneg %p181
        %p292 = pneg %p210
        %p293 = pneg %p207
        %s294 = sand.u32 %s197, 1
        %s295 = scalar_lea.sflag [#allocation5], %s294
        %s296 = sand.u32 %s197, 1
        %s297 = smul.addr %s296, 8
        %s298 = scalar_lea.vmem [#allocation4], %s297
        %s299 = smul.u32 8, %s27
        %p300 = scmp.lt.s32.totalorder %s299, 15
        %s301 = scalar_select %p300, %s299, 15
        %p302 = scmp.lt.s32.totalorder %s28, 0
        %s303 = scalar_select %p302, %s28, 0
        %s304 = smul.addr %s303, 2
        %s305 = smul.addr %s301, 2
        %s306 = sadd.s32 %s304, %s305
        %s307 = smul.addr %s306, 8
        %s308 = scalar_lea.vmem %s0, %s307
        %s309 = smul.u32 8, %s27
        %p310 = scmp.eq.s32.totalorder %s28, 0
        // Predicated region
        $region49: #{tpu_custom_call.1} parent=47 // pred_check
          %p311 = pneg %p310
        $region50: #{tpu_custom_call.1} parent=47 // pred_check_branch
          %313 = sbr.rel (%p311) target = $region52
        $region51: #{tpu_custom_call.1} parent=47 // pred_region
          %vm314 = vcmask 261120
          %315 = vst.msk [vmem:[#allocation2] sm:$0xff] %vm314, -inf
        $region52: #{tpu_custom_call.1} parent=47 // pred_fallthru
          _
        %v316 = vld [vmem:[%s308] sm:$0xff]
        %v317 = vld [vmem:[%s308 + $0x8] sm:$0xff]
        %v318 = vld [vmem:[%s308 + $0x10] sm:$0xff]
        %v319 = vld [vmem:[%s308 + $0x18] sm:$0xff]
        %v320 = vld [vmem:[%s308 + $0x20] sm:$0xff]
        %v321 = vld [vmem:[%s308 + $0x28] sm:$0xff]
        %v322 = vld [vmem:[%s308 + $0x30] sm:$0xff]
        %v323 = vld [vmem:[%s308 + $0x38] sm:$0xff]
        %v324 = vld [vmem:[%s308 + $0x40] sm:$0xff]
        %v325 = vld [vmem:[%s308 + $0x48] sm:$0xff]
        %v326 = vld [vmem:[%s308 + $0x50] sm:$0xff]
        %v327 = vld [vmem:[%s308 + $0x58] sm:$0xff]
        %v328 = vld [vmem:[%s308 + $0x60] sm:$0xff]
        %v329 = vld [vmem:[%s308 + $0x68] sm:$0xff]
        %v330 = vld [vmem:[%s308 + $0x70] sm:$0xff]
        %v331 = vld [vmem:[%s308 + $0x78] sm:$0xff]
        %v332 = vld [vmem:[%s1] sm:$0xff]
        %v333 = vld [vmem:[%s1 + $0x8] sm:$0xff]
        %v334 = vld [vmem:[%s1 + $0x10] sm:$0xff]
        %v335 = vld [vmem:[%s1 + $0x18] sm:$0xff]
        %v336 = vld [vmem:[%s1 + $0x20] sm:$0xff]
        %v337 = vld [vmem:[%s1 + $0x28] sm:$0xff]
        %v338 = vld [vmem:[%s1 + $0x30] sm:$0xff]
        %v339 = vld [vmem:[%s1 + $0x38] sm:$0xff]
        %v340 = vld [vmem:[%s1 + $0x40] sm:$0xff]
        %v341 = vld [vmem:[%s1 + $0x48] sm:$0xff]
        %v342 = vld [vmem:[%s1 + $0x50] sm:$0xff]
        %v343 = vld [vmem:[%s1 + $0x58] sm:$0xff]
        %v344 = vld [vmem:[%s1 + $0x60] sm:$0xff]
        %v345 = vld [vmem:[%s1 + $0x68] sm:$0xff]
        %v346 = vld [vmem:[%s1 + $0x70] sm:$0xff]
        %v347 = vld [vmem:[%s1 + $0x78] sm:$0xff]
        %v348 = vld [vmem:[%s1 + $0x80] sm:$0xff]
        %v349 = vld [vmem:[%s1 + $0x88] sm:$0xf]
        %v350 = vld [vmem:[%s2] sm:$0x1]
        %v352 = vlaneseq
        %v353 = vshrl.u32 %v352, 7
        %v354 = vsub.s32 0, %v353
        %v355 = vrot.slane %v350, %v354
        %vm357 = vcmask 97280
        %v359 = vsel %vm357, %v317, 0
        %v362 = vsel %vm357, %v319, 0
        %v365 = vsel %vm357, %v321, 0
        %v368 = vsel %vm357, %v323, 0
        %v371 = vsel %vm357, %v325, 0
        %v374 = vsel %vm357, %v327, 0
        %v377 = vsel %vm357, %v329, 0
        %v380 = vsel %vm357, %v331, 0
        %vm382 = vcmask 1043456
        %v384 = vsel %vm382, %v349, 0
        %386 = vmatprep.subr.mxu0 0.0
        %387 = vmatpush1.msra.mxu0 %v332
        %388 = vmatprep.subr.mxu0 0.0
        %389 = vmatpush1.msra.mxu0 %v333
        %390 = vmatprep.subr.mxu0 0.0
        %391 = vmatpush1.msra.mxu0 %v334
        %392 = vmatprep.subr.mxu0 0.0
        %393 = vmatpush1.msra.mxu0 %v335
        %394 = vmatprep.subr.mxu0 0.0
        %395 = vmatpush1.msra.mxu0 %v336
        %396 = vmatprep.subr.mxu0 0.0
        %397 = vmatpush1.msra.mxu0 %v337
        %398 = vmatprep.subr.mxu0 0.0
        %399 = vmatpush1.msra.mxu0 %v338
        %400 = vmatprep.subr.mxu0 0.0
        %401 = vmatpush1.msra.mxu0 %v339
        %402 = vmatprep.subr.mxu0 0.0
        %403 = vmatpush1.msra.mxu0 %v340
        %404 = vmatprep.subr.mxu0 0.0
        %405 = vmatpush1.msra.mxu0 %v341
        %406 = vmatprep.subr.mxu0 0.0
        %407 = vmatpush1.msra.mxu0 %v342
        %408 = vmatprep.subr.mxu0 0.0
        %409 = vmatpush1.msra.mxu0 %v343
        %410 = vmatprep.subr.mxu0 0.0
        %411 = vmatpush1.msra.mxu0 %v344
        %412 = vmatprep.subr.mxu0 0.0
        %413 = vmatpush1.msra.mxu0 %v345
        %414 = vmatprep.subr.mxu0 0.0
        %415 = vmatpush1.msra.mxu0 %v346
        %416 = vmatprep.subr.mxu0 0.0
        %417 = vmatpush1.msra.mxu0 %v347
        %418 = vmatprep.subr.mxu0 0.0
        %419 = vmatpush1.msra.mxu0 %v348
        %420 = vmatprep.subr.mxu0 0.0
        %421 = vmatpush1.msra.mxu0 %v384
        %422 = vmatprep.subr.mxu0 0.0
        %423 = vmatpush1.msra.mxu0 0.0
        %424 = vmatprep.subr.mxu0 0.0
        %425 = vmatpush1.msra.mxu0 0.0
        %426 = vmatprep.subr.mxu0 0.0
        %427 = vmatpush1.msra.mxu0 0.0
        %428 = vmatprep.subr.mxu0 0.0
        %429 = vmatpush1.msra.mxu0 0.0
        %430 = vmatprep.subr.mxu0 0.0
        %431 = vmatpush1.msra.mxu0 0.0
        %432 = vmatprep.subr.mxu0 0.0
        %433 = vmatpush1.msra.mxu0 0.0
        %434 = vmatprep.subr.mxu0 0.0
        %435 = vmatpush1.msra.mxu0 0.0
        %436 = vmatprep.subr.mxu0 0.0
        %437 = vmatpush1.msra.mxu0 0.0
        %438 = vmatprep.subr.mxu0 0.0
        %439 = vmatpush1.msra.mxu0 0.0
        %440 = vmatprep.subr.mxu0 0.0
        %441 = vmatpush1.msra.mxu0 0.0
        %442 = vmatprep.subr.mxu0 0.0
        %443 = vmatpush1.msra.mxu0 0.0
        %444 = vmatprep.subr.mxu0 0.0
        %445 = vmatpush1.msra.mxu0 0.0
        %446 = vmatprep.subr.mxu0 0.0
        %447 = vmatpush1.msra.mxu0 0.0
        %448 = vmatprep.subr.mxu0 0.0
        %449 = vmatpush1.msra.mxu0 0.0
        %450 = vmatprep.mubr.f32.mxu0 %v359
        %451 = vmatmul.mubr.f32.gmra.mrb[0].mxu0 %v316
        %v452 = vpop.f32.mrb[0].mxu0
        %v453 = vadd.f32 %v355, %v452
        %v454 = vpop.f32.mrb[0].mxu0
        %455 = vmatprep.mubr.f32.mxu0 %v362
        %456 = vmatmul.mubr.f32.gmra.mrb[0].mxu0 %v318
        %v457 = vpop.f32.mrb[0].mxu0
        %v458 = vadd.f32 %v355, %v457
        %v459 = vpop.f32.mrb[0].mxu0
        %460 = vmatprep.mubr.f32.mxu0 %v365
        %461 = vmatmul.mubr.f32.gmra.mrb[0].mxu0 %v320
        %v462 = vpop.f32.mrb[0].mxu0
        %v463 = vadd.f32 %v355, %v462
        %v464 = vpop.f32.mrb[0].mxu0
        %465 = vmatprep.mubr.f32.mxu0 %v368
        %466 = vmatmul.mubr.f32.gmra.mrb[0].mxu0 %v322
        %v467 = vpop.f32.mrb[0].mxu0
        %v468 = vadd.f32 %v355, %v467
        %v469 = vpop.f32.mrb[0].mxu0
        %470 = vmatprep.mubr.f32.mxu0 %v371
        %471 = vmatmul.mubr.f32.gmra.mrb[0].mxu0 %v324
        %v472 = vpop.f32.mrb[0].mxu0
        %v473 = vadd.f32 %v355, %v472
        %v474 = vpop.f32.mrb[0].mxu0
        %475 = vmatprep.mubr.f32.mxu0 %v374
        %476 = vmatmul.mubr.f32.gmra.mrb[0].mxu0 %v326
        %v477 = vpop.f32.mrb[0].mxu0
        %v478 = vadd.f32 %v355, %v477
        %v479 = vpop.f32.mrb[0].mxu0
        %480 = vmatprep.mubr.f32.mxu0 %v377
        %481 = vmatmul.mubr.f32.gmra.mrb[0].mxu0 %v328
        %v482 = vpop.f32.mrb[0].mxu0
        %v483 = vadd.f32 %v355, %v482
        %v484 = vpop.f32.mrb[0].mxu0
        %485 = vmatprep.mubr.f32.mxu0 %v380
        %486 = vmatmul.mubr.f32.gmra.mrb[0].mxu0 %v330
        %v487 = vpop.f32.mrb[0].mxu0
        %v488 = vadd.f32 %v355, %v487
        %v489 = vpop.f32.mrb[0].mxu0
        %490 = vdwg.mxu0
        %v491 = vmax.f32 %v453, 0.0
        %v492 = vmax.f32 %v458, 0.0
        %v493 = vmax.f32 %v463, 0.0
        %v494 = vmax.f32 %v468, 0.0
        %v495 = vmax.f32 %v473, 0.0
        %v496 = vmax.f32 %v478, 0.0
        %v497 = vmax.f32 %v483, 0.0
        %v498 = vmax.f32 %v488, 0.0
        %v499 = vld [vmem:[%s3] sm:$0xff]
        %v500 = vld [vmem:[%s3 + $0x8] sm:$0xff]
        %v501 = vld [vmem:[%s3 + $0x10] sm:$0xff]
        %v502 = vld [vmem:[%s3 + $0x18] sm:$0xff]
        %v503 = vld [vmem:[%s3 + $0x20] sm:$0xff]
        %v504 = vld [vmem:[%s3 + $0x28] sm:$0xff]
        %v505 = vld [vmem:[%s3 + $0x30] sm:$0xff]
        %v506 = vld [vmem:[%s3 + $0x38] sm:$0xff]
        %v507 = vld [vmem:[%s4] sm:$0x1]
        %v509 = vlaneseq
        %v510 = vshrl.u32 %v509, 7
        %v511 = vsub.s32 0, %v510
        %v512 = vrot.slane %v507, %v511
        %vm514 = vcmask 523264
        %v516 = vsel %vm514, %v491, 0
        %v519 = vsel %vm514, %v492, 0
        %v522 = vsel %vm514, %v493, 0
        %v525 = vsel %vm514, %v494, 0
        %v528 = vsel %vm514, %v495, 0
        %v531 = vsel %vm514, %v496, 0
        %v534 = vsel %vm514, %v497, 0
        %v537 = vsel %vm514, %v498, 0
        %539 = vmatprep.subr.mxu0 0.0
        %540 = vmatpush1.msra.mxu0 %v499
        %541 = vmatprep.subr.mxu0 0.0
        %542 = vmatpush1.msra.mxu0 %v500
        %543 = vmatprep.subr.mxu0 0.0
        %544 = vmatpush1.msra.mxu0 %v501
        %545 = vmatprep.subr.mxu0 0.0
        %546 = vmatpush1.msra.mxu0 %v502
        %547 = vmatprep.subr.mxu0 0.0
        %548 = vmatpush1.msra.mxu0 %v503
        %549 = vmatprep.subr.mxu0 0.0
        %550 = vmatpush1.msra.mxu0 %v504
        %551 = vmatprep.subr.mxu0 0.0
        %552 = vmatpush1.msra.mxu0 %v505
        %553 = vmatprep.subr.mxu0 0.0
        %554 = vmatpush1.msra.mxu0 %v506
        %555 = vmatprep.subr.mxu0 0.0
        %556 = vmatpush1.msra.mxu0 0.0
        %557 = vmatprep.subr.mxu0 0.0
        %558 = vmatpush1.msra.mxu0 0.0
        %559 = vmatprep.subr.mxu0 0.0
        %560 = vmatpush1.msra.mxu0 0.0
        %561 = vmatprep.subr.mxu0 0.0
        %562 = vmatpush1.msra.mxu0 0.0
        %563 = vmatprep.subr.mxu0 0.0
        %564 = vmatpush1.msra.mxu0 0.0
        %565 = vmatprep.subr.mxu0 0.0
        %566 = vmatpush1.msra.mxu0 0.0
        %567 = vmatprep.subr.mxu0 0.0
        %568 = vmatpush1.msra.mxu0 0.0
        %569 = vmatprep.subr.mxu0 0.0
        %570 = vmatpush1.msra.mxu0 0.0
        %571 = vmatprep.subr.mxu0 0.0
        %572 = vmatpush1.msra.mxu0 0.0
        %573 = vmatprep.subr.mxu0 0.0
        %574 = vmatpush1.msra.mxu0 0.0
        %575 = vmatprep.subr.mxu0 0.0
        %576 = vmatpush1.msra.mxu0 0.0
        %577 = vmatprep.subr.mxu0 0.0
        %578 = vmatpush1.msra.mxu0 0.0
        %579 = vmatprep.subr.mxu0 0.0
        %580 = vmatpush1.msra.mxu0 0.0
        %581 = vmatprep.subr.mxu0 0.0
        %582 = vmatpush1.msra.mxu0 0.0
        %583 = vmatprep.subr.mxu0 0.0
        %584 = vmatpush1.msra.mxu0 0.0
        %585 = vmatprep.subr.mxu0 0.0
        %586 = vmatpush1.msra.mxu0 0.0
        %587 = vmatprep.subr.mxu0 0.0
        %588 = vmatpush1.msra.mxu0 0.0
        %589 = vmatprep.subr.mxu0 0.0
        %590 = vmatpush1.msra.mxu0 0.0
        %591 = vmatprep.subr.mxu0 0.0
        %592 = vmatpush1.msra.mxu0 0.0
        %593 = vmatprep.subr.mxu0 0.0
        %594 = vmatpush1.msra.mxu0 0.0
        %595 = vmatprep.subr.mxu0 0.0
        %596 = vmatpush1.msra.mxu0 0.0
        %597 = vmatprep.subr.mxu0 0.0
        %598 = vmatpush1.msra.mxu0 0.0
        %599 = vmatprep.subr.mxu0 0.0
        %600 = vmatpush1.msra.mxu0 0.0
        %601 = vmatprep.subr.mxu0 0.0
        %602 = vmatpush1.msra.mxu0 0.0
        %603 = vmatprep.mubr.f32.mxu0 0.0
        %604 = vmatmul.mubr.f32.gmra.mrb[0].mxu0 %v516
        %v605 = vpop.f32.mrb[0].mxu0
        %v606 = vadd.f32 %v512, %v605
        %v607 = vpop.f32.mrb[0].mxu0
        %608 = vmatprep.mubr.f32.mxu0 0.0
        %609 = vmatmul.mubr.f32.gmra.mrb[0].mxu0 %v519
        %v610 = vpop.f32.mrb[0].mxu0
        %v611 = vadd.f32 %v512, %v610
        %v612 = vpop.f32.mrb[0].mxu0
        %613 = vmatprep.mubr.f32.mxu0 0.0
        %614 = vmatmul.mubr.f32.gmra.mrb[0].mxu0 %v522
        %v615 = vpop.f32.mrb[0].mxu0
        %v616 = vadd.f32 %v512, %v615
        %v617 = vpop.f32.mrb[0].mxu0
        %618 = vmatprep.mubr.f32.mxu0 0.0
        %619 = vmatmul.mubr.f32.gmra.mrb[0].mxu0 %v525
        %v620 = vpop.f32.mrb[0].mxu0
        %v621 = vadd.f32 %v512, %v620
        %v622 = vpop.f32.mrb[0].mxu0
        %623 = vmatprep.mubr.f32.mxu0 0.0
        %624 = vmatmul.mubr.f32.gmra.mrb[0].mxu0 %v528
        %v625 = vpop.f32.mrb[0].mxu0
        %v626 = vadd.f32 %v512, %v625
        %v627 = vpop.f32.mrb[0].mxu0
        %628 = vmatprep.mubr.f32.mxu0 0.0
        %629 = vmatmul.mubr.f32.gmra.mrb[0].mxu0 %v531
        %v630 = vpop.f32.mrb[0].mxu0
        %v631 = vadd.f32 %v512, %v630
        %v632 = vpop.f32.mrb[0].mxu0
        %633 = vmatprep.mubr.f32.mxu0 0.0
        %634 = vmatmul.mubr.f32.gmra.mrb[0].mxu0 %v534
        %v635 = vpop.f32.mrb[0].mxu0
        %v636 = vadd.f32 %v512, %v635
        %v637 = vpop.f32.mrb[0].mxu0
        %638 = vmatprep.mubr.f32.mxu0 0.0
        %639 = vmatmul.mubr.f32.gmra.mrb[0].mxu0 %v537
        %v640 = vpop.f32.mrb[0].mxu0
        %v641 = vadd.f32 %v512, %v640
        %v642 = vpop.f32.mrb[0].mxu0
        %643 = vdwg.mxu0
        %v644 = vmax.f32 %v606, 0.0
        %v645 = vmax.f32 %v611, 0.0
        %v646 = vmax.f32 %v616, 0.0
        %v647 = vmax.f32 %v621, 0.0
        %v648 = vmax.f32 %v626, 0.0
        %v649 = vmax.f32 %v631, 0.0
        %v650 = vmax.f32 %v636, 0.0
        %v651 = vmax.f32 %v641, 0.0
        %vm652 = vcmask 261120
        %v653 = vsel %vm652, %v644, -inf
        %v654 = vrot.slane %v653, 4
        %v655 = vmax.f32 %v653, %v654
        %v656 = vrot.slane %v655, 2
        %v657 = vmax.f32 %v655, %v656
        %v658 = vrot.slane %v657, 1
        %v659 = vmax.f32 %v657, %v658
        %v660 = vsel %vm652, %v645, -inf
        %v661 = vrot.slane %v660, 4
        %v662 = vmax.f32 %v660, %v661
        %v663 = vrot.slane %v662, 2
        %v664 = vmax.f32 %v662, %v663
        %v665 = vrot.slane %v664, 1
        %v666 = vmax.f32 %v664, %v665
        %v667 = vsel %vm652, %v646, -inf
        %v668 = vrot.slane %v667, 4
        %v669 = vmax.f32 %v667, %v668
        %v670 = vrot.slane %v669, 2
        %v671 = vmax.f32 %v669, %v670
        %v672 = vrot.slane %v671, 1
        %v673 = vmax.f32 %v671, %v672
        %v674 = vsel %vm652, %v647, -inf
        %v675 = vrot.slane %v674, 4
        %v676 = vmax.f32 %v674, %v675
        %v677 = vrot.slane %v676, 2
        %v678 = vmax.f32 %v676, %v677
        %v679 = vrot.slane %v678, 1
        %v680 = vmax.f32 %v678, %v679
        %v681 = vsel %vm652, %v648, -inf
        %v682 = vrot.slane %v681, 4
        %v683 = vmax.f32 %v681, %v682
        %v684 = vrot.slane %v683, 2
        %v685 = vmax.f32 %v683, %v684
        %v686 = vrot.slane %v685, 1
        %v687 = vmax.f32 %v685, %v686
        %v688 = vsel %vm652, %v649, -inf
        %v689 = vrot.slane %v688, 4
        %v690 = vmax.f32 %v688, %v689
        %v691 = vrot.slane %v690, 2
        %v692 = vmax.f32 %v690, %v691
        %v693 = vrot.slane %v692, 1
        %v694 = vmax.f32 %v692, %v693
        %v695 = vsel %vm652, %v650, -inf
        %v696 = vrot.slane %v695, 4
        %v697 = vmax.f32 %v695, %v696
        %v698 = vrot.slane %v697, 2
        %v699 = vmax.f32 %v697, %v698
        %v700 = vrot.slane %v699, 1
        %v701 = vmax.f32 %v699, %v700
        %v702 = vsel %vm652, %v651, -inf
        %v703 = vrot.slane %v702, 4
        %v704 = vmax.f32 %v702, %v703
        %v705 = vrot.slane %v704, 2
        %v706 = vmax.f32 %v704, %v705
        %v707 = vrot.slane %v706, 1
        %v708 = vmax.f32 %v706, %v707
        %v709 = vld [vmem:[#allocation2] sm:$0xff]
        %vm718 = vcmask 1041409
        %v719 = vsel %vm718, %v666, %v659
        %vm720 = vcmask 1042434
        %v721 = vsel %vm720, %v673, %v719
        %vm722 = vcmask 1043459
        %v723 = vsel %vm722, %v680, %v721
        %vm724 = vcmask 1044484
        %v725 = vsel %vm724, %v687, %v723
        %vm726 = vcmask 1045509
        %v727 = vsel %vm726, %v694, %v725
        %vm728 = vcmask 1046534
        %v729 = vsel %vm728, %v701, %v727
        %vm730 = vcmask 1047559
        %v731 = vsel %vm730, %v708, %v729
        %v733 = vmax.f32 %v709, %v731
        %734 = vst.msk [vmem:[#allocation2] sm:$0xff] %vm652, %v733
        // Predicated region
        $region53: #{tpu_custom_call.1} parent=47 // pred_check
          %p735 = pneg %p310
        $region54: #{tpu_custom_call.1} parent=47 // pred_check_branch
          %737 = sbr.rel (%p735) target = $region56
        $region55: #{tpu_custom_call.1} parent=47 // pred_region
          %v738 = vld [vmem:[#allocation2] sm:$0xff]
          %v739 = vld [vmem:[%s5] sm:$0x1]
          %v741 = vlaneseq
          %v742 = vshrl.u32 %v741, 7
          %v743 = vsub.s32 0, %v742
          %v744 = vrot.slane %v739, %v743
          %v746 = vmul.f32 %v738, %v744
          %v747 = vsel %vm652, %v746, 0.0
          %748 = vadd.xlane.f32.xlu0 %v747
          %v749 = vpop.xlane.xlu0 %748
          %v750 = vld [vmem:[#allocation3] sm:$0x1]
          %v752 = vlaneseq
          %v753 = vshrl.u32 %v752, 7
          %v754 = vsub.s32 0, %v753
          %v755 = vrot.slane %v750, %v754
          %v757 = vadd.f32 %v749, %v755
          %v758 = vxor.u32 %v757, 2147483648
          %v759 = vmul.f32 %v758, 1.442695
          %v760 = vpow.pop %v759
          %v761 = vadd.f32 %v760, 1.0
          %v762 = vrcp.pop %v761
          %v763 = vmul.f32 1.0, %v762
          %765 = vset.pattern.permute.xlu0 0
          %766 = vperm.xlu0 %765, %v763
          %v767 = vpop.permute.xlu0 %766
          %769 = vst [vmem:[%s298] sm:$0xff] %v767
        $region56: #{tpu_custom_call.1} parent=47 // pred_fallthru
          _
        %s770 = sand.u32 %s197, 1
        %s771 = scalar_lea.sflag [#allocation5], %s770
        %s772 = sand.u32 %s197, 1
        %s773 = smul.addr %s772, 8
        %s774 = scalar_lea.vmem [#allocation4], %s773
        // Predicated region
        $region57: #{tpu_custom_call.1} parent=47 // pred_check
          %p775 = pneg %p207
        $region58: #{tpu_custom_call.1} parent=47 // pred_check_branch
          %777 = sbr.rel (%p775) target = $region60
        $region59: #{tpu_custom_call.1} parent=47 // pred_region
          %s779 = ssub.s32 128, 128
          %780 = vsyncadd %s771, %s779
          %s781 = smul.addr %s27, 128
          %s782 = scalar_lea.hbm %s7, %s781
          %s784 = sshll.u32 %s774, 4
          %s785 = int_to_ptr.vmem [resolvable:$true] %s784
          %787 = dma.vmem_to_hbm [thread:$0]  %s785, 128, %s782, %s771
        $region60: #{tpu_custom_call.1} parent=47 // pred_fallthru
          _
      $region48: #{tpu_custom_call.1} parent=5 // pred_fallthru
        _
      %p788 = scmp.le.s32.totalorder 2, %s18
      // Predicated region
      $region61: #{tpu_custom_call.1} parent=5 // pred_check
        %p789 = pneg %p788
      $region62: #{tpu_custom_call.1} parent=5 // pred_check_branch
        %791 = sbr.rel (%p789) target = $region64
      $region63: #{tpu_custom_call.1} parent=5 // pred_region
        %s792 = ssub.s32 %s18, 2
        // Predicated region
        $region65: #{tpu_custom_call.1} parent=63 // pred_check
          %p793 = pneg %p213
        $region66: #{tpu_custom_call.1} parent=63 // pred_check_branch
          %795 = sbr.rel (%p793) target = $region68
        $region67: #{tpu_custom_call.1} parent=63 // pred_region
          %s796 = sand.u32 %s198, 1
          %s797 = scalar_lea.sflag [#allocation5], %s796
          %s798 = sand.u32 %s198, 1
          %s799 = smul.addr %s798, 8
          %s800 = scalar_lea.vmem [#allocation4], %s799
          %801 = dma.done %s797, 128
        $region68: #{tpu_custom_call.1} parent=63 // pred_fallthru
          _
      $region64: #{tpu_custom_call.1} parent=5 // pred_fallthru
        _
    $region6: #{tpu_custom_call.1} parent=1 // loop_footer
      %s22 = sadd.s32 1, %s18
    $region7: #{tpu_custom_call.1} parent=1 // loop_footer_branch
      %17 = sbr.rel target = $region3
    $region8: #{tpu_custom_call.1} parent=1 // loop_exit
      _
    %802 = vsyncpa [#allocation5], 1
    %s803 = scalar_lea.sflag [#allocation5], 1
    %804 = vsyncpa %s803, 1

</llo_original>
